<compile_context>
chip_gen: v5e
topology: v5e:2x2
jax: 0.10.0
libtpu: 0.0.40
codegen_flags: <defaults>
</compile_context>

<pallas_src>
import math

import numpy as np
import jax
import jax.numpy as jnp
from jax.experimental import pallas as pl
from jax.experimental.pallas import tpu as pltpu

# ----------------------------- config --------------------------------------
B = 2          # batch
SX = 8         # x sequence length (queries)
SY = 16        # y sequence length (keys / values)
E = 32         # embed_dim
H = 4          # num_head
D = E // H     # attention_head_size

# Block-diagonal logit bias (0 within a batch, -1e30 across batches) so the
# per-head attention can treat all batches as one sublane-stacked problem.
_rb = np.arange(B * SX)[:, None] // SX
_cb = np.arange(B * SY)[None, :] // SY
XBIAS_NP = np.where(_rb == _cb, 0.0, -1e30).astype(np.float32)   # (B*SX, B*SY)


# ----------------------------- kernel --------------------------------------
def mask_attention_kernel(x_ref, y_ref, mx_ref, my_ref, xbias_ref,
                          wq_ref, bq_ref, wkv_ref, bkv_ref,
                          wo_ref, bo_ref, o_ref):
    """Single invocation: whole (B*SX, E) / (B*SY, E) problem in VMEM."""
    x = x_ref[...]                     # (B*SX, E)
    y = y_ref[...]                     # (B*SY, E)

    scale = jnp.float32(1.0 / math.sqrt(D))

    # Q projection; query mask and 1/sqrt(D) folded into one lane-broadcast mul.
    q = (jnp.dot(x, wq_ref[...], preferred_element_type=jnp.float32)
         + bq_ref[...]) * (mx_ref[...] * scale)                 # (B*SX, E)

    # Fused K|V projection; key/value mask lane-broadcast over the 2E lanes.
    kv = (jnp.dot(y, wkv_ref[...], preferred_element_type=jnp.float32)
          + bkv_ref[...]) * my_ref[...]                         # (B*SY, 2E)

    xbias = xbias_ref[...]                                      # (B*SX, B*SY)
    wo = wo_ref[...]                                            # (E, E)

    acc = jnp.zeros((B * SX, E), jnp.float32)

    # Static (fully unrolled) loop over heads only; every matmul covers all
    # batches at once (cross-batch logits killed by xbias).
    for h in range(H):
        qh = q[:, h * D:(h + 1) * D]                            # (B*SX, D)
        kh = kv[:, h * D:(h + 1) * D]                           # (B*SY, D)
        vh = kv[:, E + h * D:E + (h + 1) * D]                   # (B*SY, D)

        # q @ k^T without materializing a transpose (NT dot_general).
        s = jax.lax.dot_general(
            qh, kh, (((1,), (1,)), ((), ())),
            preferred_element_type=jnp.float32) + xbias         # (B*SX, B*SY)
        s = s - jnp.max(s, axis=-1, keepdims=True)
        p = jnp.exp(s)
        denom = jnp.sum(p, axis=-1, keepdims=True)              # (B*SX, 1)

        # attn_dropout: identity in eval mode.
        ctx = jnp.dot(p, vh, preferred_element_type=jnp.float32)   # (B*SX, D)
        # Fold softmax 1/sum into the context; approx recip runs on the EUP.
        ctx = ctx * pl.reciprocal(denom, approx=True)

        # Per-head output projection accumulation (sublane slice of Wo).
        acc = acc + jnp.dot(ctx, wo[h * D:(h + 1) * D, :],
                            preferred_element_type=jnp.float32)    # (B*SX, E)

    # proj_dropout: identity in eval mode.
    o_ref[...] = (acc + bo_ref[...]).astype(o_ref.dtype)


# ----------------------------- wrapper --------------------------------------
def mask_attention(x, y, mask_x, mask_y, params):
    """x: (B,SX,E), y: (B,SY,E), mask_x: (B,SX), mask_y: (B,SY)."""
    wq_t, bq, wk_t, bk, wv_t, bv, wo_t, bo = params

    # Flatten batch into the sublane axis; masks stay as (rows, 1) columns
    # and are lane-broadcast inside the kernel.
    xf = x.reshape(B * SX, E)
    yf = y.reshape(B * SY, E)
    mx = mask_x.reshape(B * SX, 1).astype(jnp.float32)
    my = mask_y.reshape(B * SY, 1).astype(jnp.float32)
    xbias = jnp.asarray(XBIAS_NP)

    # Fuse K|V weights / biases; reshape biases to (1, .) for broadcasting.
    wkv_t = jnp.concatenate([wk_t, wv_t], axis=1)        # (E, 2E)
    bkv2 = jnp.concatenate([bk, bv]).reshape(1, 2 * E)   # (1, 2E)
    bq2 = bq.reshape(1, E)
    bo2 = bo.reshape(1, E)

    vmem = lambda: pl.BlockSpec(memory_space=pltpu.MemorySpace.VMEM)

    flops = (2 * (B * SX) * E * E                     # Q projection
             + 2 * (B * SY) * E * (2 * E)             # fused K|V projection
             + H * (2 * (B * SX) * (B * SY) * D       # q @ k^T (batch-merged)
                    + 2 * (B * SX) * (B * SY) * D     # p @ v
                    + 2 * (B * SX) * D * E))          # per-head out projection
    transcendentals = H * (B * SX) * (B * SY) + H * (B * SX)
    bytes_accessed = 4 * (xf.size + yf.size + mx.size + my.size + xbias.size
                          + wq_t.size + E + wkv_t.size + 2 * E
                          + wo_t.size + E + B * SX * E)

    out_flat = pl.pallas_call(
        mask_attention_kernel,
        out_shape=jax.ShapeDtypeStruct((B * SX, E), jnp.float32),
        in_specs=[vmem() for _ in range(11)],
        out_specs=vmem(),
        cost_estimate=pl.CostEstimate(flops=flops,
                                      transcendentals=transcendentals,
                                      bytes_accessed=bytes_accessed),
    )(xf, yf, mx, my, xbias, wq_t, bq2, wkv_t, bkv2, wo_t, bo2)

    return out_flat.reshape(B, SX, E)


# ----------------------- pure-JAX reference (for checking) ------------------
def mask_attention_ref(x, y, mask_x, mask_y, params):
    wq_t, bq, wk_t, bk, wv_t, bv, wo_t, bo = params
    q = (x @ wq_t + bq) * mask_x[..., None]
    k = (y @ wk_t + bk) * mask_y[..., None]
    v = (y @ wv_t + bv) * mask_y[..., None]

    def split(t, s):
        return t.reshape(B, s, H, D).transpose(0, 2, 1, 3)   # (B,H,S,D)

    qh, kh, vh = split(q, SX), split(k, SY), split(v, SY)
    scores = jnp.einsum("bhqd,bhkd->bhqk", qh, kh) / math.sqrt(D)
    probs = jax.nn.softmax(scores, axis=-1)
    ctx = jnp.einsum("bhqk,bhkd->bhqd", probs, vh)
    ctx = ctx.transpose(0, 2, 1, 3).reshape(B, SX, E)
    return ctx @ wo_t + bo


# ----------------------------- main ------------------------------------------
if __name__ == "__main__":
    key = jax.random.PRNGKey(0)
    keys = jax.random.split(key, 12)

    # Deterministic synthetic parameters (PyTorch Linear weight is (out,in);
    # we store the transposed (in,out) version used by the kernel).
    scale = 0.1
    wq_t = scale * jax.random.normal(keys[0], (E, E), jnp.float32)
    bq = scale * jax.random.normal(keys[1], (E,), jnp.float32)
    wk_t = scale * jax.random.normal(keys[2], (E, E), jnp.float32)
    bk = scale * jax.random.normal(keys[3], (E,), jnp.float32)
    wv_t = scale * jax.random.normal(keys[4], (E, E), jnp.float32)
    bv = scale * jax.random.normal(keys[5], (E,), jnp.float32)
    wo_t = scale * jax.random.normal(keys[6], (E, E), jnp.float32)
    bo = scale * jax.random.normal(keys[7], (E,), jnp.float32)
    params = (wq_t, bq, wk_t, bk, wv_t, bv, wo_t, bo)

    # Inputs.
    x = jax.random.normal(keys[8], (B, SX, E), jnp.float32)
    y = jax.random.normal(keys[9], (B, SY, E), jnp.float32)
    mask_x = (jax.random.uniform(keys[10], (B, SX)) > 0.3).astype(jnp.float32)
    mask_y = (jax.random.uniform(keys[11], (B, SY)) > 0.3).astype(jnp.float32)

    out = mask_attention(x, y, mask_x, mask_y, params)
    out = jax.block_until_ready(out)

    ref = mask_attention_ref(x, y, mask_x, mask_y, params)
    assert out.shape == (B, SX, E)
    # Tolerance relaxed slightly vs. exact division because the softmax
    # normalization uses the EUP approximate reciprocal.
    assert jnp.allclose(out, ref, atol=5e-3, rtol=5e-3), (
        float(jnp.max(jnp.abs(out - ref))))

    # TODO(synk): attn_dropout / proj_dropout are eval-mode identities here;
    # training-mode dropout (pltpu.prng_*) is not implemented.
    print("KERNEL_OK")
</pallas_src>

<mosaic_0001>
module attributes {stable_mosaic.version = 11 : i64} {
  func.func @mask_attention_kernel(%arg0: memref<16x32xf32, #tpu.memory_space<vmem>>, %arg1: memref<32x32xf32, #tpu.memory_space<vmem>>, %arg2: memref<16x1xf32, #tpu.memory_space<vmem>>, %arg3: memref<32x1xf32, #tpu.memory_space<vmem>>, %arg4: memref<16x32xf32, #tpu.memory_space<vmem>>, %arg5: memref<32x32xf32, #tpu.memory_space<vmem>>, %arg6: memref<1x32xf32, #tpu.memory_space<vmem>>, %arg7: memref<32x64xf32, #tpu.memory_space<vmem>>, %arg8: memref<1x64xf32, #tpu.memory_space<vmem>>, %arg9: memref<32x32xf32, #tpu.memory_space<vmem>>, %arg10: memref<1x32xf32, #tpu.memory_space<vmem>>, %arg11: memref<16x32xf32, #tpu.memory_space<vmem>>) attributes {dimension_semantics = [], scalar_prefetch = 0 : i64, scratch_operands = 0 : i64, tpu.core_type = #tpu.core_type<tc>} {
    %c0 = arith.constant 0 : index
    %c0_0 = arith.constant 0 : index
    %0 = vector.load %arg0[%c0, %c0_0] : memref<16x32xf32, #tpu.memory_space<vmem>>, vector<16x32xf32>
    %c0_1 = arith.constant 0 : index
    %c0_2 = arith.constant 0 : index
    %1 = vector.load %arg1[%c0_1, %c0_2] : memref<32x32xf32, #tpu.memory_space<vmem>>, vector<32x32xf32>
    %c0_3 = arith.constant 0 : index
    %c0_4 = arith.constant 0 : index
    %2 = vector.load %arg5[%c0_3, %c0_4] : memref<32x32xf32, #tpu.memory_space<vmem>>, vector<32x32xf32>
    %cst = arith.constant dense<0.000000e+00> : vector<16x32xf32>
    %3 = tpu.matmul %0, %2, %cst {dimension_numbers = #tpu.dot_dimension_numbers<[1], [0], [0], [1], [0, 0, 1, 1], [], []>} : vector<16x32xf32>, vector<32x32xf32>, vector<16x32xf32> -> vector<16x32xf32>
    %c0_5 = arith.constant 0 : index
    %c0_6 = arith.constant 0 : index
    %4 = vector.load %arg6[%c0_5, %c0_6] : memref<1x32xf32, #tpu.memory_space<vmem>>, vector<1x32xf32>
    %5 = vector.broadcast %4 : vector<1x32xf32> to vector<16x32xf32>
    %6 = arith.addf %3, %5 : vector<16x32xf32>
    %c0_7 = arith.constant 0 : index
    %c0_8 = arith.constant 0 : index
    %7 = vector.load %arg2[%c0_7, %c0_8] : memref<16x1xf32, #tpu.memory_space<vmem>>, vector<16x1xf32>
    %cst_9 = arith.constant 0.353553385 : f32
    %8 = vector.broadcast %cst_9 : f32 to vector<16x1xf32>
    %9 = arith.mulf %7, %8 : vector<16x1xf32>
    %10 = vector.broadcast %9 : vector<16x1xf32> to vector<16x32xf32>
    %11 = arith.mulf %6, %10 : vector<16x32xf32>
    %c0_10 = arith.constant 0 : index
    %c0_11 = arith.constant 0 : index
    %12 = vector.load %arg7[%c0_10, %c0_11] : memref<32x64xf32, #tpu.memory_space<vmem>>, vector<32x64xf32>
    %cst_12 = arith.constant dense<0.000000e+00> : vector<32x64xf32>
    %13 = tpu.matmul %1, %12, %cst_12 {dimension_numbers = #tpu.dot_dimension_numbers<[1], [0], [0], [1], [0, 0, 1, 1], [], []>} : vector<32x32xf32>, vector<32x64xf32>, vector<32x64xf32> -> vector<32x64xf32>
    %c0_13 = arith.constant 0 : index
    %c0_14 = arith.constant 0 : index
    %14 = vector.load %arg8[%c0_13, %c0_14] : memref<1x64xf32, #tpu.memory_space<vmem>>, vector<1x64xf32>
    %15 = vector.broadcast %14 : vector<1x64xf32> to vector<32x64xf32>
    %16 = arith.addf %13, %15 : vector<32x64xf32>
    %c0_15 = arith.constant 0 : index
    %c0_16 = arith.constant 0 : index
    %17 = vector.load %arg3[%c0_15, %c0_16] : memref<32x1xf32, #tpu.memory_space<vmem>>, vector<32x1xf32>
    %18 = vector.broadcast %17 : vector<32x1xf32> to vector<32x64xf32>
    %19 = arith.mulf %16, %18 : vector<32x64xf32>
    %c0_17 = arith.constant 0 : index
    %c0_18 = arith.constant 0 : index
    %20 = vector.load %arg4[%c0_17, %c0_18] : memref<16x32xf32, #tpu.memory_space<vmem>>, vector<16x32xf32>
    %c0_19 = arith.constant 0 : index
    %c0_20 = arith.constant 0 : index
    %21 = vector.load %arg9[%c0_19, %c0_20] : memref<32x32xf32, #tpu.memory_space<vmem>>, vector<32x32xf32>
    %cst_21 = arith.constant 0.000000e+00 : f32
    %22 = vector.broadcast %cst_21 : f32 to vector<16x32xf32>
    %23 = vector.extract_strided_slice %11 {offsets = [0, 0], sizes = [16, 8], strides = [1, 1]} : vector<16x32xf32> to vector<16x8xf32>
    %24 = vector.extract_strided_slice %19 {offsets = [0, 0], sizes = [32, 8], strides = [1, 1]} : vector<32x64xf32> to vector<32x8xf32>
    %25 = vector.extract_strided_slice %19 {offsets = [0, 32], sizes = [32, 8], strides = [1, 1]} : vector<32x64xf32> to vector<32x8xf32>
    %cst_22 = arith.constant dense<0.000000e+00> : vector<16x32xf32>
    %26 = tpu.matmul %23, %24, %cst_22 {dimension_numbers = #tpu.dot_dimension_numbers<[1], [1], [0], [0], [0, 0, 1, 0], [], []>} : vector<16x8xf32>, vector<32x8xf32>, vector<16x32xf32> -> vector<16x32xf32>
    %27 = arith.addf %26, %20 : vector<16x32xf32>
    %cst_23 = arith.constant dense<0xFF800000> : vector<16xf32>
    %28 = vector.multi_reduction <maximumf>, %27, %cst_23 [1] : vector<16x32xf32> to vector<16xf32>
    %29 = vector.shape_cast %28 : vector<16xf32> to vector<16x1xf32>
    %30 = vector.broadcast %29 : vector<16x1xf32> to vector<16x32xf32>
    %31 = arith.subf %27, %30 : vector<16x32xf32>
    %32 = math.exp %31 : vector<16x32xf32>
    %cst_24 = arith.constant dense<0.000000e+00> : vector<16xf32>
    %33 = vector.multi_reduction <add>, %32, %cst_24 [1] : vector<16x32xf32> to vector<16xf32>
    %34 = vector.shape_cast %33 : vector<16xf32> to vector<16x1xf32>
    %cst_25 = arith.constant dense<0.000000e+00> : vector<16x8xf32>
    %35 = tpu.matmul %32, %25, %cst_25 {dimension_numbers = #tpu.dot_dimension_numbers<[1], [0], [0], [1], [0, 0, 1, 1], [], []>} : vector<16x32xf32>, vector<32x8xf32>, vector<16x8xf32> -> vector<16x8xf32>
    %36 = tpu.reciprocal %34 {approx = true} : vector<16x1xf32> -> vector<16x1xf32>
    %37 = vector.broadcast %36 : vector<16x1xf32> to vector<16x8xf32>
    %38 = arith.mulf %35, %37 : vector<16x8xf32>
    %39 = vector.extract_strided_slice %21 {offsets = [0, 0], sizes = [8, 32], strides = [1, 1]} : vector<32x32xf32> to vector<8x32xf32>
    %cst_26 = arith.constant dense<0.000000e+00> : vector<16x32xf32>
    %40 = tpu.matmul %38, %39, %cst_26 {dimension_numbers = #tpu.dot_dimension_numbers<[1], [0], [0], [1], [0, 0, 1, 1], [], []>} : vector<16x8xf32>, vector<8x32xf32>, vector<16x32xf32> -> vector<16x32xf32>
    %41 = arith.addf %22, %40 : vector<16x32xf32>
    %42 = vector.extract_strided_slice %11 {offsets = [0, 8], sizes = [16, 8], strides = [1, 1]} : vector<16x32xf32> to vector<16x8xf32>
    %43 = vector.extract_strided_slice %19 {offsets = [0, 8], sizes = [32, 8], strides = [1, 1]} : vector<32x64xf32> to vector<32x8xf32>
    %44 = vector.extract_strided_slice %19 {offsets = [0, 40], sizes = [32, 8], strides = [1, 1]} : vector<32x64xf32> to vector<32x8xf32>
    %cst_27 = arith.constant dense<0.000000e+00> : vector<16x32xf32>
    %45 = tpu.matmul %42, %43, %cst_27 {dimension_numbers = #tpu.dot_dimension_numbers<[1], [1], [0], [0], [0, 0, 1, 0], [], []>} : vector<16x8xf32>, vector<32x8xf32>, vector<16x32xf32> -> vector<16x32xf32>
    %46 = arith.addf %45, %20 : vector<16x32xf32>
    %cst_28 = arith.constant dense<0xFF800000> : vector<16xf32>
    %47 = vector.multi_reduction <maximumf>, %46, %cst_28 [1] : vector<16x32xf32> to vector<16xf32>
    %48 = vector.shape_cast %47 : vector<16xf32> to vector<16x1xf32>
    %49 = vector.broadcast %48 : vector<16x1xf32> to vector<16x32xf32>
    %50 = arith.subf %46, %49 : vector<16x32xf32>
    %51 = math.exp %50 : vector<16x32xf32>
    %cst_29 = arith.constant dense<0.000000e+00> : vector<16xf32>
    %52 = vector.multi_reduction <add>, %51, %cst_29 [1] : vector<16x32xf32> to vector<16xf32>
    %53 = vector.shape_cast %52 : vector<16xf32> to vector<16x1xf32>
    %cst_30 = arith.constant dense<0.000000e+00> : vector<16x8xf32>
    %54 = tpu.matmul %51, %44, %cst_30 {dimension_numbers = #tpu.dot_dimension_numbers<[1], [0], [0], [1], [0, 0, 1, 1], [], []>} : vector<16x32xf32>, vector<32x8xf32>, vector<16x8xf32> -> vector<16x8xf32>
    %55 = tpu.reciprocal %53 {approx = true} : vector<16x1xf32> -> vector<16x1xf32>
    %56 = vector.broadcast %55 : vector<16x1xf32> to vector<16x8xf32>
    %57 = arith.mulf %54, %56 : vector<16x8xf32>
    %58 = vector.extract_strided_slice %21 {offsets = [8, 0], sizes = [8, 32], strides = [1, 1]} : vector<32x32xf32> to vector<8x32xf32>
    %cst_31 = arith.constant dense<0.000000e+00> : vector<16x32xf32>
    %59 = tpu.matmul %57, %58, %cst_31 {dimension_numbers = #tpu.dot_dimension_numbers<[1], [0], [0], [1], [0, 0, 1, 1], [], []>} : vector<16x8xf32>, vector<8x32xf32>, vector<16x32xf32> -> vector<16x32xf32>
    %60 = arith.addf %41, %59 : vector<16x32xf32>
    %61 = vector.extract_strided_slice %11 {offsets = [0, 16], sizes = [16, 8], strides = [1, 1]} : vector<16x32xf32> to vector<16x8xf32>
    %62 = vector.extract_strided_slice %19 {offsets = [0, 16], sizes = [32, 8], strides = [1, 1]} : vector<32x64xf32> to vector<32x8xf32>
    %63 = vector.extract_strided_slice %19 {offsets = [0, 48], sizes = [32, 8], strides = [1, 1]} : vector<32x64xf32> to vector<32x8xf32>
    %cst_32 = arith.constant dense<0.000000e+00> : vector<16x32xf32>
    %64 = tpu.matmul %61, %62, %cst_32 {dimension_numbers = #tpu.dot_dimension_numbers<[1], [1], [0], [0], [0, 0, 1, 0], [], []>} : vector<16x8xf32>, vector<32x8xf32>, vector<16x32xf32> -> vector<16x32xf32>
    %65 = arith.addf %64, %20 : vector<16x32xf32>
    %cst_33 = arith.constant dense<0xFF800000> : vector<16xf32>
    %66 = vector.multi_reduction <maximumf>, %65, %cst_33 [1] : vector<16x32xf32> to vector<16xf32>
    %67 = vector.shape_cast %66 : vector<16xf32> to vector<16x1xf32>
    %68 = vector.broadcast %67 : vector<16x1xf32> to vector<16x32xf32>
    %69 = arith.subf %65, %68 : vector<16x32xf32>
    %70 = math.exp %69 : vector<16x32xf32>
    %cst_34 = arith.constant dense<0.000000e+00> : vector<16xf32>
    %71 = vector.multi_reduction <add>, %70, %cst_34 [1] : vector<16x32xf32> to vector<16xf32>
    %72 = vector.shape_cast %71 : vector<16xf32> to vector<16x1xf32>
    %cst_35 = arith.constant dense<0.000000e+00> : vector<16x8xf32>
    %73 = tpu.matmul %70, %63, %cst_35 {dimension_numbers = #tpu.dot_dimension_numbers<[1], [0], [0], [1], [0, 0, 1, 1], [], []>} : vector<16x32xf32>, vector<32x8xf32>, vector<16x8xf32> -> vector<16x8xf32>
    %74 = tpu.reciprocal %72 {approx = true} : vector<16x1xf32> -> vector<16x1xf32>
    %75 = vector.broadcast %74 : vector<16x1xf32> to vector<16x8xf32>
    %76 = arith.mulf %73, %75 : vector<16x8xf32>
    %77 = vector.extract_strided_slice %21 {offsets = [16, 0], sizes = [8, 32], strides = [1, 1]} : vector<32x32xf32> to vector<8x32xf32>
    %cst_36 = arith.constant dense<0.000000e+00> : vector<16x32xf32>
    %78 = tpu.matmul %76, %77, %cst_36 {dimension_numbers = #tpu.dot_dimension_numbers<[1], [0], [0], [1], [0, 0, 1, 1], [], []>} : vector<16x8xf32>, vector<8x32xf32>, vector<16x32xf32> -> vector<16x32xf32>
    %79 = arith.addf %60, %78 : vector<16x32xf32>
    %80 = vector.extract_strided_slice %11 {offsets = [0, 24], sizes = [16, 8], strides = [1, 1]} : vector<16x32xf32> to vector<16x8xf32>
    %81 = vector.extract_strided_slice %19 {offsets = [0, 24], sizes = [32, 8], strides = [1, 1]} : vector<32x64xf32> to vector<32x8xf32>
    %82 = vector.extract_strided_slice %19 {offsets = [0, 56], sizes = [32, 8], strides = [1, 1]} : vector<32x64xf32> to vector<32x8xf32>
    %cst_37 = arith.constant dense<0.000000e+00> : vector<16x32xf32>
    %83 = tpu.matmul %80, %81, %cst_37 {dimension_numbers = #tpu.dot_dimension_numbers<[1], [1], [0], [0], [0, 0, 1, 0], [], []>} : vector<16x8xf32>, vector<32x8xf32>, vector<16x32xf32> -> vector<16x32xf32>
    %84 = arith.addf %83, %20 : vector<16x32xf32>
    %cst_38 = arith.constant dense<0xFF800000> : vector<16xf32>
    %85 = vector.multi_reduction <maximumf>, %84, %cst_38 [1] : vector<16x32xf32> to vector<16xf32>
    %86 = vector.shape_cast %85 : vector<16xf32> to vector<16x1xf32>
    %87 = vector.broadcast %86 : vector<16x1xf32> to vector<16x32xf32>
    %88 = arith.subf %84, %87 : vector<16x32xf32>
    %89 = math.exp %88 : vector<16x32xf32>
    %cst_39 = arith.constant dense<0.000000e+00> : vector<16xf32>
    %90 = vector.multi_reduction <add>, %89, %cst_39 [1] : vector<16x32xf32> to vector<16xf32>
    %91 = vector.shape_cast %90 : vector<16xf32> to vector<16x1xf32>
    %cst_40 = arith.constant dense<0.000000e+00> : vector<16x8xf32>
    %92 = tpu.matmul %89, %82, %cst_40 {dimension_numbers = #tpu.dot_dimension_numbers<[1], [0], [0], [1], [0, 0, 1, 1], [], []>} : vector<16x32xf32>, vector<32x8xf32>, vector<16x8xf32> -> vector<16x8xf32>
    %93 = tpu.reciprocal %91 {approx = true} : vector<16x1xf32> -> vector<16x1xf32>
    %94 = vector.broadcast %93 : vector<16x1xf32> to vector<16x8xf32>
    %95 = arith.mulf %92, %94 : vector<16x8xf32>
    %96 = vector.extract_strided_slice %21 {offsets = [24, 0], sizes = [8, 32], strides = [1, 1]} : vector<32x32xf32> to vector<8x32xf32>
    %cst_41 = arith.constant dense<0.000000e+00> : vector<16x32xf32>
    %97 = tpu.matmul %95, %96, %cst_41 {dimension_numbers = #tpu.dot_dimension_numbers<[1], [0], [0], [1], [0, 0, 1, 1], [], []>} : vector<16x8xf32>, vector<8x32xf32>, vector<16x32xf32> -> vector<16x32xf32>
    %98 = arith.addf %79, %97 : vector<16x32xf32>
    %c0_42 = arith.constant 0 : index
    %c0_43 = arith.constant 0 : index
    %99 = vector.load %arg10[%c0_42, %c0_43] : memref<1x32xf32, #tpu.memory_space<vmem>>, vector<1x32xf32>
    %100 = vector.broadcast %99 : vector<1x32xf32> to vector<16x32xf32>
    %101 = arith.addf %98, %100 : vector<16x32xf32>
    %c0_44 = arith.constant 0 : index
    %c0_45 = arith.constant 0 : index
    %102 = vector.load %arg11[%c0_44, %c0_45] : memref<16x32xf32, #tpu.memory_space<vmem>>, vector<16x32xf32>
    tpu.vector_store %arg11[%c0_44, %c0_45], %101 {strides = array<i32>} : memref<16x32xf32, #tpu.memory_space<vmem>>, vector<16x32xf32>,
    return
  }
}

</mosaic_0001>

<llo_original>
// kernel: tpu_custom_call.1
$region0: #{tpu_custom_call.1}
  #allocation0 [shape = 'u32[]', space=smem, size = 0x4, offset = 0x4, fixed_abs, tag = 'smem constant byte address 0x4 - core index']
  #allocation1 [shape = 'u32[72,128]{1,0:T(1,128)}', space=vmem, size = 0x9000, scoped, tag = 'internal scratch']
  %s0 = inlined_call_operand.vmem [shape: f32[16,32], index: 0, kind: input, shape index: {}]
  %s1 = inlined_call_operand.vmem [shape: f32[32,32], index: 1, kind: input, shape index: {}]
  %s2 = inlined_call_operand.vmem [shape: f32[16,1], index: 2, kind: input, shape index: {}]
  %s3 = inlined_call_operand.vmem [shape: f32[32,1], index: 3, kind: input, shape index: {}]
  %s4 = inlined_call_operand.hbm [shape: f32[16,32], index: 4, kind: input, shape index: {}]
  %s5 = inlined_call_operand.hbm [shape: f32[32,32], index: 5, kind: input, shape index: {}]
  %s6 = inlined_call_operand.vmem [shape: f32[1,32], index: 6, kind: input, shape index: {}]
  %s7 = inlined_call_operand.hbm [shape: f32[32,64], index: 7, kind: input, shape index: {}]
  %s8 = inlined_call_operand.vmem [shape: f32[1,64], index: 8, kind: input, shape index: {}]
  %s9 = inlined_call_operand.hbm [shape: f32[32,32], index: 9, kind: input, shape index: {}]
  %s10 = inlined_call_operand.vmem [shape: f32[1,32], index: 10, kind: input, shape index: {}]
  %s11 = inlined_call_operand.hbm [shape: f32[16,32], index: 11, kind: output, shape index: {}]
  %s12 = sld [smem:[#allocation0]]
  $region70: #{tpu_custom_call.1} parent=0
    _
  %s14 = ssub.s32 1, %s12
  %s15 = scalar_select 0, %s14, %s12
  $region1: #{tpu_custom_call.1} parent=0
    #allocation2 [shape = 'u8[8192]{0}', space=vmem, size = 0x2000, scoped, tag = 'input window, operand 4, single buffered']
    #allocation3 [shape = 's32[1]{0}', space=sflag, size = 0x4, scoped, tag = 'scoped memory for tpu_custom_call.1']
    #allocation4 [shape = 's32[1]{0}', space=sflag, size = 0x4, scoped, tag = 'scoped memory for tpu_custom_call.1']
    #allocation5 [shape = 'u8[16384]{0}', space=vmem, size = 0x4000, scoped, tag = 'input window, operand 5, single buffered']
    #allocation6 [shape = 's32[1]{0}', space=sflag, size = 0x4, scoped, tag = 'scoped memory for tpu_custom_call.1']
    #allocation7 [shape = 'u8[16384]{0}', space=vmem, size = 0x4000, scoped, tag = 'input window, operand 7, single buffered']
    #allocation8 [shape = 'u8[16384]{0}', space=vmem, size = 0x4000, scoped, tag = 'input window, operand 9, single buffered']
    #allocation9 [shape = 's32[1]{0}', space=sflag, size = 0x4, scoped, tag = 'scoped memory for tpu_custom_call.1']
    #allocation10 [shape = 'u8[8192]{0}', space=vmem, size = 0x2000, scoped, tag = 'output window, operand 0, single buffered']
    %16 = vsyncpa [#allocation3], 0
    %17 = vsyncpa [#allocation6], 0
    %18 = vsyncpa [#allocation9], 0
    %19 = vsyncpa [#allocation4], 0
    // Predicated region
    $region2: #{tpu_custom_call.1} parent=1 // pred_check
      _
    $region3: #{tpu_custom_call.1} parent=1 // pred_check_branch
      %21 = sbr.rel (0) target = $region5
    $region4: #{tpu_custom_call.1} parent=1 // pred_region
      _
    $region5: #{tpu_custom_call.1} parent=1 // pred_fallthru
      _
    // Predicated region
    $region6: #{tpu_custom_call.1} parent=1 // pred_check
      _
    $region7: #{tpu_custom_call.1} parent=1 // pred_check_branch
      %23 = sbr.rel (0) target = $region9
    $region8: #{tpu_custom_call.1} parent=1 // pred_region
      _
    $region9: #{tpu_custom_call.1} parent=1 // pred_fallthru
      _
    // Predicated region
    $region10: #{tpu_custom_call.1} parent=1 // pred_check
      _
    $region11: #{tpu_custom_call.1} parent=1 // pred_check_branch
      %25 = sbr.rel (0) target = $region13
    $region12: #{tpu_custom_call.1} parent=1 // pred_region
      _
    $region13: #{tpu_custom_call.1} parent=1 // pred_fallthru
      _
    // Predicated region
    $region14: #{tpu_custom_call.1} parent=1 // pred_check
      _
    $region15: #{tpu_custom_call.1} parent=1 // pred_check_branch
      %27 = sbr.rel (0) target = $region17
    $region16: #{tpu_custom_call.1} parent=1 // pred_region
      _
    $region17: #{tpu_custom_call.1} parent=1 // pred_fallthru
      _
    // Predicated region
    $region18: #{tpu_custom_call.1} parent=1 // pred_check
      _
    $region19: #{tpu_custom_call.1} parent=1 // pred_check_branch
      %29 = sbr.rel (0) target = $region21
    $region20: #{tpu_custom_call.1} parent=1 // pred_region
      %31 = vsyncadd [#allocation3], 0
      %s32 = sshll.u32 %s4, 4
      %s33 = int_to_ptr.hbm [resolvable:$true] %s32
      %s34 = sshll.u32 [#allocation2], 4
      %s35 = int_to_ptr.vmem [resolvable:$true] %s34
      %40 = dma.hbm_to_vmem [thread:$0]  %s33, 256, %s35, [#allocation3], 128, 128, 8
    $region21: #{tpu_custom_call.1} parent=1 // pred_fallthru
      _
    // Predicated region
    $region22: #{tpu_custom_call.1} parent=1 // pred_check
      _
    $region23: #{tpu_custom_call.1} parent=1 // pred_check_branch
      %42 = sbr.rel (0) target = $region25
    $region24: #{tpu_custom_call.1} parent=1 // pred_region
      %44 = vsyncadd [#allocation6], 0
      %s45 = sshll.u32 %s5, 4
      %s46 = int_to_ptr.hbm [resolvable:$true] %s45
      %s47 = sshll.u32 [#allocation5], 4
      %s48 = int_to_ptr.vmem [resolvable:$true] %s47
      %53 = dma.hbm_to_vmem [thread:$0]  %s46, 512, %s48, [#allocation6], 128, 128, 8
    $region25: #{tpu_custom_call.1} parent=1 // pred_fallthru
      _
    // Predicated region
    $region26: #{tpu_custom_call.1} parent=1 // pred_check
      _
    $region27: #{tpu_custom_call.1} parent=1 // pred_check_branch
      %55 = sbr.rel (0) target = $region29
    $region28: #{tpu_custom_call.1} parent=1 // pred_region
      _
    $region29: #{tpu_custom_call.1} parent=1 // pred_fallthru
      _
    // Predicated region
    $region30: #{tpu_custom_call.1} parent=1 // pred_check
      _
    $region31: #{tpu_custom_call.1} parent=1 // pred_check_branch
      %57 = sbr.rel (0) target = $region33
    $region32: #{tpu_custom_call.1} parent=1 // pred_region
      %59 = vsyncadd [#allocation6], 0
      %s60 = sshll.u32 %s7, 4
      %s61 = int_to_ptr.hbm [resolvable:$true] %s60
      %s62 = sshll.u32 [#allocation7], 4
      %s63 = int_to_ptr.vmem [resolvable:$true] %s62
      %68 = dma.hbm_to_vmem [thread:$0]  %s61, 512, %s63, [#allocation6], 128, 128, 8
    $region33: #{tpu_custom_call.1} parent=1 // pred_fallthru
      _
    // Predicated region
    $region34: #{tpu_custom_call.1} parent=1 // pred_check
      _
    $region35: #{tpu_custom_call.1} parent=1 // pred_check_branch
      %70 = sbr.rel (0) target = $region37
    $region36: #{tpu_custom_call.1} parent=1 // pred_region
      _
    $region37: #{tpu_custom_call.1} parent=1 // pred_fallthru
      _
    // Predicated region
    $region38: #{tpu_custom_call.1} parent=1 // pred_check
      _
    $region39: #{tpu_custom_call.1} parent=1 // pred_check_branch
      %72 = sbr.rel (0) target = $region41
    $region40: #{tpu_custom_call.1} parent=1 // pred_region
      %74 = vsyncadd [#allocation9], 0
      %s75 = sshll.u32 %s9, 4
      %s76 = int_to_ptr.hbm [resolvable:$true] %s75
      %s77 = sshll.u32 [#allocation8], 4
      %s78 = int_to_ptr.vmem [resolvable:$true] %s77
      %83 = dma.hbm_to_vmem [thread:$0]  %s76, 512, %s78, [#allocation9], 128, 128, 8
    $region41: #{tpu_custom_call.1} parent=1 // pred_fallthru
      _
    // Predicated region
    $region42: #{tpu_custom_call.1} parent=1 // pred_check
      _
    $region43: #{tpu_custom_call.1} parent=1 // pred_check_branch
      %85 = sbr.rel (0) target = $region45
    $region44: #{tpu_custom_call.1} parent=1 // pred_region
      _
    $region45: #{tpu_custom_call.1} parent=1 // pred_fallthru
      _
    // Predicated region
    $region46: #{tpu_custom_call.1} parent=1 // pred_check
      _
    $region47: #{tpu_custom_call.1} parent=1 // pred_check_branch
      %87 = sbr.rel (0) target = $region49
    $region48: #{tpu_custom_call.1} parent=1 // pred_region
      %89 = dma.done [#allocation3], 256
    $region49: #{tpu_custom_call.1} parent=1 // pred_fallthru
      _
    // Predicated region
    $region50: #{tpu_custom_call.1} parent=1 // pred_check
      _
    $region51: #{tpu_custom_call.1} parent=1 // pred_check_branch
      %91 = sbr.rel (0) target = $region53
    $region52: #{tpu_custom_call.1} parent=1 // pred_region
      %93 = dma.done [#allocation6], 512
    $region53: #{tpu_custom_call.1} parent=1 // pred_fallthru
      _
    // Predicated region
    $region54: #{tpu_custom_call.1} parent=1 // pred_check
      _
    $region55: #{tpu_custom_call.1} parent=1 // pred_check_branch
      %95 = sbr.rel (0) target = $region57
    $region56: #{tpu_custom_call.1} parent=1 // pred_region
      %97 = dma.done [#allocation6], 512
    $region57: #{tpu_custom_call.1} parent=1 // pred_fallthru
      _
    // Predicated region
    $region58: #{tpu_custom_call.1} parent=1 // pred_check
      _
    $region59: #{tpu_custom_call.1} parent=1 // pred_check_branch
      %99 = sbr.rel (0) target = $region61
    $region60: #{tpu_custom_call.1} parent=1 // pred_region
      %101 = dma.done [#allocation9], 512
    $region61: #{tpu_custom_call.1} parent=1 // pred_fallthru
      _
    %v102 = vld [vmem:[%s0] sm:$0xff]
    %v103 = vld [vmem:[%s0 + $0x8] sm:$0xff]
    %v104 = vld [vmem:[%s1] sm:$0xff]
    %v105 = vld [vmem:[%s1 + $0x8] sm:$0xff]
    %v106 = vld [vmem:[%s1 + $0x10] sm:$0xff]
    %v107 = vld [vmem:[%s1 + $0x18] sm:$0xff]
    %v108 = vld [vmem:[#allocation5] sm:$0xff]
    %v109 = vld [vmem:[#allocation5 + $0x8] sm:$0xff]
    %v110 = vld [vmem:[#allocation5 + $0x10] sm:$0xff]
    %v111 = vld [vmem:[#allocation5 + $0x18] sm:$0xff]
    %v112 = vld [vmem:[%s6] sm:$0x1]
    %v114 = vperm.slane %v112, 0
    %vm116 = vcmask 261120
    %v118 = vsel %vm116, %v102, 0
    %v121 = vsel %vm116, %v103, 0
    %123 = vmatpush.msra.mxu0 0.0
    %124 = vmatpush.msra.mxu0 0.0
    %125 = vmatpush.msra.mxu0 0.0
    %126 = vmatpush.msra.mxu0 0.0
    %127 = vmatpush.msra.mxu0 0.0
    %128 = vmatpush.msra.mxu0 0.0
    %129 = vmatpush.msra.mxu0 0.0
    %130 = vmatpush.msra.mxu0 0.0
    %131 = vmatpush.msra.mxu0 0.0
    %132 = vmatpush.msra.mxu0 0.0
    %133 = vmatpush.msra.mxu0 0.0
    %134 = vmatpush.msra.mxu0 0.0
    %135 = vmatpush.msra.mxu0 %v111
    %136 = vmatpush.msra.mxu0 %v110
    %137 = vmatpush.msra.mxu0 %v109
    %138 = vmatpush.msra.mxu0 %v108
    %139 = vmatmul.f32.gmra.mxu0 %v118
    %v140 = vpop.f32.mrf.mxu0
    %v141 = vadd.f32 %v114, %v140
    %142 = vmatmul.f32.gmra.mxu0 %v121
    %v143 = vpop.f32.mrf.mxu0
    %v144 = vadd.f32 %v114, %v143
    %145 = vdwg.mxu0
    %v146 = vld [vmem:[%s2] sm:$0xff]
    %v147 = vld [vmem:[%s2 + $0x8] sm:$0xff]
    %v148 = vmul.f32 %v146, 0.35355338
    %v149 = vmul.f32 %v147, 0.35355338
    %151 = vset.pattern.permute.xlu0 0
    %152 = vperm.xlu0 %151, %v148
    %v153 = vpop.permute.xlu0 %152
    %156 = vset.pattern.permute.xlu0 0
    %157 = vperm.xlu0 %156, %v149
    %v158 = vpop.permute.xlu0 %157
    %v160 = vmul.f32 %v141, %v153
    %v161 = vmul.f32 %v144, %v158
    %v162 = vld [vmem:[#allocation7] sm:$0xff]
    %v163 = vld [vmem:[#allocation7 + $0x8] sm:$0xff]
    %v164 = vld [vmem:[#allocation7 + $0x10] sm:$0xff]
    %v165 = vld [vmem:[#allocation7 + $0x18] sm:$0xff]
    %v166 = vld [vmem:[%s8] sm:$0x1]
    %v168 = vperm.slane %v166, 0
    %v171 = vsel %vm116, %v104, 0
    %v174 = vsel %vm116, %v105, 0
    %v177 = vsel %vm116, %v106, 0
    %v180 = vsel %vm116, %v107, 0
    %182 = vmatpush.msra.mxu0 0.0
    %183 = vmatpush.msra.mxu0 0.0
    %184 = vmatpush.msra.mxu0 0.0
    %185 = vmatpush.msra.mxu0 0.0
    %186 = vmatpush.msra.mxu0 0.0
    %187 = vmatpush.msra.mxu0 0.0
    %188 = vmatpush.msra.mxu0 0.0
    %189 = vmatpush.msra.mxu0 0.0
    %190 = vmatpush.msra.mxu0 0.0
    %191 = vmatpush.msra.mxu0 0.0
    %192 = vmatpush.msra.mxu0 0.0
    %193 = vmatpush.msra.mxu0 0.0
    %194 = vmatpush.msra.mxu0 %v165
    %195 = vmatpush.msra.mxu0 %v164
    %196 = vmatpush.msra.mxu0 %v163
    %197 = vmatpush.msra.mxu0 %v162
    %198 = vmatmul.f32.gmra.mxu0 %v171
    %v199 = vpop.f32.mrf.mxu0
    %v200 = vadd.f32 %v168, %v199
    %201 = vmatmul.f32.gmra.mxu0 %v174
    %v202 = vpop.f32.mrf.mxu0
    %v203 = vadd.f32 %v168, %v202
    %204 = vmatmul.f32.gmra.mxu0 %v177
    %v205 = vpop.f32.mrf.mxu0
    %v206 = vadd.f32 %v168, %v205
    %207 = vmatmul.f32.gmra.mxu0 %v180
    %v208 = vpop.f32.mrf.mxu0
    %v209 = vadd.f32 %v168, %v208
    %210 = vdwg.mxu0
    %v211 = vld [vmem:[%s3] sm:$0xff]
    %v212 = vld [vmem:[%s3 + $0x8] sm:$0xff]
    %v213 = vld [vmem:[%s3 + $0x10] sm:$0xff]
    %v214 = vld [vmem:[%s3 + $0x18] sm:$0xff]
    %216 = vset.pattern.permute.xlu0 0
    %217 = vperm.xlu0 %216, %v211
    %v218 = vpop.permute.xlu0 %217
    %221 = vset.pattern.permute.xlu0 0
    %222 = vperm.xlu0 %221, %v212
    %v223 = vpop.permute.xlu0 %222
    %226 = vset.pattern.permute.xlu0 0
    %227 = vperm.xlu0 %226, %v213
    %v228 = vpop.permute.xlu0 %227
    %231 = vset.pattern.permute.xlu0 0
    %232 = vperm.xlu0 %231, %v214
    %v233 = vpop.permute.xlu0 %232
    %v235 = vmul.f32 %v200, %v218
    %v236 = vmul.f32 %v203, %v223
    %v237 = vmul.f32 %v206, %v228
    %v238 = vmul.f32 %v209, %v233
    %v239 = vld [vmem:[#allocation2] sm:$0xff]
    %v240 = vld [vmem:[#allocation2 + $0x8] sm:$0xff]
    %v241 = vld [vmem:[#allocation8] sm:$0xff]
    %v242 = vld [vmem:[#allocation8 + $0x8] sm:$0xff]
    %v243 = vld [vmem:[#allocation8 + $0x10] sm:$0xff]
    %v244 = vld [vmem:[#allocation8 + $0x18] sm:$0xff]
    %vm245 = vcmask 64512
    %v247 = vsel %vm245, %v160, 0
    %v250 = vsel %vm245, %v161, 0
    %v253 = vsel %vm245, %v235, 0
    %v256 = vsel %vm245, %v236, 0
    %v259 = vsel %vm245, %v237, 0
    %v262 = vsel %vm245, %v238, 0
    %264 = vmatpush.xpose.msra.mxu0 0.0
    %265 = vmatpush.xpose.msra.mxu0 0.0
    %266 = vmatpush.xpose.msra.mxu0 0.0
    %267 = vmatpush.xpose.msra.mxu0 0.0
    %268 = vmatpush.xpose.msra.mxu0 0.0
    %269 = vmatpush.xpose.msra.mxu0 0.0
    %270 = vmatpush.xpose.msra.mxu0 0.0
    %271 = vmatpush.xpose.msra.mxu0 0.0
    %272 = vmatpush.xpose.msra.mxu0 0.0
    %273 = vmatpush.xpose.msra.mxu0 0.0
    %274 = vmatpush.xpose.msra.mxu0 0.0
    %275 = vmatpush.xpose.msra.mxu0 0.0
    %276 = vmatpush.xpose.msra.mxu0 %v262
    %277 = vmatpush.xpose.msra.mxu0 %v259
    %278 = vmatpush.xpose.msra.mxu0 %v256
    %279 = vmatpush.xpose.msra.mxu0 %v253
    %280 = vmatmul.f32.gmra.mxu0 %v247
    %v281 = vpop.f32.mrf.mxu0
    %v282 = vadd.f32 %v239, %v281
    %283 = vmatmul.f32.gmra.mxu0 %v250
    %v284 = vpop.f32.mrf.mxu0
    %v285 = vadd.f32 %v240, %v284
    %286 = vdwg.mxu0
    %v287 = vsel %vm116, %v282, -inf
    %288 = vmax.xlane.f32.xlu0 %v287
    %v289 = vpop.xlane.xlu0 %288
    %v290 = vsel %vm116, %v285, -inf
    %291 = vmax.xlane.f32.xlu0 %v290
    %v292 = vpop.xlane.xlu0 %291
    %v293 = vsub.f32 %v282, %v289
    %v294 = vsub.f32 %v285, %v292
    %v295 = vmul.f32 %v293, 1.442695
    %v296 = vpow.pop %v295
    %v297 = vmul.f32 %v294, 1.442695
    %v298 = vpow.pop %v297
    %v299 = vsel %vm116, %v296, 0.0
    %300 = vadd.xlane.f32.xlu0 %v299
    %v301 = vpop.xlane.xlu0 %300
    %v302 = vsel %vm116, %v298, 0.0
    %303 = vadd.xlane.f32.xlu0 %v302
    %v304 = vpop.xlane.xlu0 %303
    %305 = vrot.lane.b32.xlu0 %v235, 96
    %v306 = vpop.permute.xlu0 %305
    %307 = vrot.lane.b32.xlu0 %v236, 96
    %v308 = vpop.permute.xlu0 %307
    %309 = vrot.lane.b32.xlu0 %v237, 96
    %v310 = vpop.permute.xlu0 %309
    %311 = vrot.lane.b32.xlu0 %v238, 96
    %v312 = vpop.permute.xlu0 %311
    %v318 = vsel %vm116, %v296, 0
    %v321 = vsel %vm116, %v298, 0
    %323 = vmatpush.msra.mxu0 0.0
    %324 = vmatpush.msra.mxu0 0.0
    %325 = vmatpush.msra.mxu0 0.0
    %326 = vmatpush.msra.mxu0 0.0
    %327 = vmatpush.msra.mxu0 0.0
    %328 = vmatpush.msra.mxu0 0.0
    %329 = vmatpush.msra.mxu0 0.0
    %330 = vmatpush.msra.mxu0 0.0
    %331 = vmatpush.msra.mxu0 0.0
    %332 = vmatpush.msra.mxu0 0.0
    %333 = vmatpush.msra.mxu0 0.0
    %334 = vmatpush.msra.mxu0 0.0
    %335 = vmatpush.msra.mxu0 %v312
    %336 = vmatpush.msra.mxu0 %v310
    %337 = vmatpush.msra.mxu0 %v308
    %338 = vmatpush.msra.mxu0 %v306
    %339 = vmatmul.f32.gmra.mxu0 %v318
    %v340 = vpop.f32.mrf.mxu0
    %v341 = vadd.f32 0.0, %v340
    %342 = vmatmul.f32.gmra.mxu0 %v321
    %v343 = vpop.f32.mrf.mxu0
    %v344 = vadd.f32 0.0, %v343
    %345 = vdwg.mxu0
    %v346 = vrcp.pop %v301
    %v347 = vrcp.pop %v304
    %v348 = vmul.f32 %v341, %v346
    %v349 = vmul.f32 %v344, %v347
    %350 = vrot.lane.b32.xlu0 %v160, 120
    %v351 = vpop.permute.xlu0 %350
    %352 = vrot.lane.b32.xlu0 %v161, 120
    %v353 = vpop.permute.xlu0 %352
    %354 = vrot.lane.b32.xlu0 %v235, 120
    %v355 = vpop.permute.xlu0 %354
    %356 = vrot.lane.b32.xlu0 %v236, 120
    %v357 = vpop.permute.xlu0 %356
    %358 = vrot.lane.b32.xlu0 %v237, 120
    %v359 = vpop.permute.xlu0 %358
    %360 = vrot.lane.b32.xlu0 %v238, 120
    %v361 = vpop.permute.xlu0 %360
    %v362 = vsel %vm245, %v351, 0
    %v364 = vsel %vm245, %v353, 0
    %v366 = vsel %vm245, %v355, 0
    %v368 = vsel %vm245, %v357, 0
    %v370 = vsel %vm245, %v359, 0
    %v372 = vsel %vm245, %v361, 0
    %374 = vmatpush.xpose.msra.mxu0 0.0
    %375 = vmatpush.xpose.msra.mxu0 0.0
    %376 = vmatpush.xpose.msra.mxu0 0.0
    %377 = vmatpush.xpose.msra.mxu0 0.0
    %378 = vmatpush.xpose.msra.mxu0 0.0
    %379 = vmatpush.xpose.msra.mxu0 0.0
    %380 = vmatpush.xpose.msra.mxu0 0.0
    %381 = vmatpush.xpose.msra.mxu0 0.0
    %382 = vmatpush.xpose.msra.mxu0 0.0
    %383 = vmatpush.xpose.msra.mxu0 0.0
    %384 = vmatpush.xpose.msra.mxu0 0.0
    %385 = vmatpush.xpose.msra.mxu0 0.0
    %386 = vmatpush.xpose.msra.mxu0 %v372
    %387 = vmatpush.xpose.msra.mxu0 %v370
    %388 = vmatpush.xpose.msra.mxu0 %v368
    %389 = vmatpush.xpose.msra.mxu0 %v366
    %390 = vmatmul.f32.gmra.mxu0 %v362
    %v391 = vpop.f32.mrf.mxu0
    %v392 = vadd.f32 %v239, %v391
    %393 = vmatmul.f32.gmra.mxu0 %v364
    %v394 = vpop.f32.mrf.mxu0
    %v395 = vadd.f32 %v240, %v394
    %396 = vdwg.mxu0
    %v397 = vsel %vm116, %v392, -inf
    %398 = vmax.xlane.f32.xlu0 %v397
    %v399 = vpop.xlane.xlu0 %398
    %v400 = vsel %vm116, %v395, -inf
    %401 = vmax.xlane.f32.xlu0 %v400
    %v402 = vpop.xlane.xlu0 %401
    %v403 = vsub.f32 %v392, %v399
    %v404 = vsub.f32 %v395, %v402
    %v405 = vmul.f32 %v403, 1.442695
    %v406 = vpow.pop %v405
    %v407 = vmul.f32 %v404, 1.442695
    %v408 = vpow.pop %v407
    %v409 = vsel %vm116, %v406, 0.0
    %410 = vadd.xlane.f32.xlu0 %v409
    %v411 = vpop.xlane.xlu0 %410
    %v412 = vsel %vm116, %v408, 0.0
    %413 = vadd.xlane.f32.xlu0 %v412
    %v414 = vpop.xlane.xlu0 %413
    %415 = vrot.lane.b32.xlu0 %v235, 88
    %v416 = vpop.permute.xlu0 %415
    %417 = vrot.lane.b32.xlu0 %v236, 88
    %v418 = vpop.permute.xlu0 %417
    %419 = vrot.lane.b32.xlu0 %v237, 88
    %v420 = vpop.permute.xlu0 %419
    %421 = vrot.lane.b32.xlu0 %v238, 88
    %v422 = vpop.permute.xlu0 %421
    %v428 = vsel %vm116, %v406, 0
    %v431 = vsel %vm116, %v408, 0
    %433 = vmatpush.msra.mxu0 0.0
    %434 = vmatpush.msra.mxu0 0.0
    %435 = vmatpush.msra.mxu0 0.0
    %436 = vmatpush.msra.mxu0 0.0
    %437 = vmatpush.msra.mxu0 0.0
    %438 = vmatpush.msra.mxu0 0.0
    %439 = vmatpush.msra.mxu0 0.0
    %440 = vmatpush.msra.mxu0 0.0
    %441 = vmatpush.msra.mxu0 0.0
    %442 = vmatpush.msra.mxu0 0.0
    %443 = vmatpush.msra.mxu0 0.0
    %444 = vmatpush.msra.mxu0 0.0
    %445 = vmatpush.msra.mxu0 %v422
    %446 = vmatpush.msra.mxu0 %v420
    %447 = vmatpush.msra.mxu0 %v418
    %448 = vmatpush.msra.mxu0 %v416
    %449 = vmatmul.f32.gmra.mxu0 %v428
    %v450 = vpop.f32.mrf.mxu0
    %v451 = vadd.f32 0.0, %v450
    %452 = vmatmul.f32.gmra.mxu0 %v431
    %v453 = vpop.f32.mrf.mxu0
    %v454 = vadd.f32 0.0, %v453
    %455 = vdwg.mxu0
    %v456 = vrcp.pop %v411
    %v457 = vrcp.pop %v414
    %v458 = vmul.f32 %v451, %v456
    %v459 = vmul.f32 %v454, %v457
    %v461 = vsel %vm245, %v458, 0
    %v464 = vsel %vm245, %v459, 0
    %466 = vmatpush.msra.mxu0 0.0
    %467 = vmatpush.msra.mxu0 0.0
    %468 = vmatpush.msra.mxu0 0.0
    %469 = vmatpush.msra.mxu0 0.0
    %470 = vmatpush.msra.mxu0 0.0
    %471 = vmatpush.msra.mxu0 0.0
    %472 = vmatpush.msra.mxu0 0.0
    %473 = vmatpush.msra.mxu0 0.0
    %474 = vmatpush.msra.mxu0 0.0
    %475 = vmatpush.msra.mxu0 0.0
    %476 = vmatpush.msra.mxu0 0.0
    %477 = vmatpush.msra.mxu0 0.0
    %478 = vmatpush.msra.mxu0 0.0
    %479 = vmatpush.msra.mxu0 0.0
    %480 = vmatpush.msra.mxu0 0.0
    %481 = vmatpush.msra.mxu0 %v242
    %482 = vmatmul.f32.gmra.mxu0 %v461
    %v483 = vpop.f32.mrf.mxu0
    %v484 = vadd.f32 0.0, %v483
    %485 = vmatmul.f32.gmra.mxu0 %v464
    %v486 = vpop.f32.mrf.mxu0
    %v487 = vadd.f32 0.0, %v486
    %488 = vdwg.mxu0
    %v490 = vsel %vm245, %v348, 0
    %v493 = vsel %vm245, %v349, 0
    %495 = vmatpush.msra.mxu0 0.0
    %496 = vmatpush.msra.mxu0 0.0
    %497 = vmatpush.msra.mxu0 0.0
    %498 = vmatpush.msra.mxu0 0.0
    %499 = vmatpush.msra.mxu0 0.0
    %500 = vmatpush.msra.mxu0 0.0
    %501 = vmatpush.msra.mxu0 0.0
    %502 = vmatpush.msra.mxu0 0.0
    %503 = vmatpush.msra.mxu0 0.0
    %504 = vmatpush.msra.mxu0 0.0
    %505 = vmatpush.msra.mxu0 0.0
    %506 = vmatpush.msra.mxu0 0.0
    %507 = vmatpush.msra.mxu0 0.0
    %508 = vmatpush.msra.mxu0 0.0
    %509 = vmatpush.msra.mxu0 0.0
    %510 = vmatpush.msra.mxu0 %v241
    %511 = vmatmul.f32.gmra.mxu0 %v490
    %v512 = vpop.f32.mrf.mxu0
    %v513 = vadd.f32 %v484, %v512
    %514 = vmatmul.f32.gmra.mxu0 %v493
    %v515 = vpop.f32.mrf.mxu0
    %v516 = vadd.f32 %v487, %v515
    %517 = vdwg.mxu0
    %518 = vrot.lane.b32.xlu0 %v160, 112
    %v519 = vpop.permute.xlu0 %518
    %520 = vrot.lane.b32.xlu0 %v161, 112
    %v521 = vpop.permute.xlu0 %520
    %522 = vrot.lane.b32.xlu0 %v235, 112
    %v523 = vpop.permute.xlu0 %522
    %524 = vrot.lane.b32.xlu0 %v236, 112
    %v525 = vpop.permute.xlu0 %524
    %526 = vrot.lane.b32.xlu0 %v237, 112
    %v527 = vpop.permute.xlu0 %526
    %528 = vrot.lane.b32.xlu0 %v238, 112
    %v529 = vpop.permute.xlu0 %528
    %v530 = vsel %vm245, %v519, 0
    %v532 = vsel %vm245, %v521, 0
    %v534 = vsel %vm245, %v523, 0
    %v536 = vsel %vm245, %v525, 0
    %v538 = vsel %vm245, %v527, 0
    %v540 = vsel %vm245, %v529, 0
    %542 = vmatpush.xpose.msra.mxu0 0.0
    %543 = vmatpush.xpose.msra.mxu0 0.0
    %544 = vmatpush.xpose.msra.mxu0 0.0
    %545 = vmatpush.xpose.msra.mxu0 0.0
    %546 = vmatpush.xpose.msra.mxu0 0.0
    %547 = vmatpush.xpose.msra.mxu0 0.0
    %548 = vmatpush.xpose.msra.mxu0 0.0
    %549 = vmatpush.xpose.msra.mxu0 0.0
    %550 = vmatpush.xpose.msra.mxu0 0.0
    %551 = vmatpush.xpose.msra.mxu0 0.0
    %552 = vmatpush.xpose.msra.mxu0 0.0
    %553 = vmatpush.xpose.msra.mxu0 0.0
    %554 = vmatpush.xpose.msra.mxu0 %v540
    %555 = vmatpush.xpose.msra.mxu0 %v538
    %556 = vmatpush.xpose.msra.mxu0 %v536
    %557 = vmatpush.xpose.msra.mxu0 %v534
    %558 = vmatmul.f32.gmra.mxu0 %v530
    %v559 = vpop.f32.mrf.mxu0
    %v560 = vadd.f32 %v239, %v559
    %561 = vmatmul.f32.gmra.mxu0 %v532
    %v562 = vpop.f32.mrf.mxu0
    %v563 = vadd.f32 %v240, %v562
    %564 = vdwg.mxu0
    %v565 = vsel %vm116, %v560, -inf
    %566 = vmax.xlane.f32.xlu0 %v565
    %v567 = vpop.xlane.xlu0 %566
    %v568 = vsel %vm116, %v563, -inf
    %569 = vmax.xlane.f32.xlu0 %v568
    %v570 = vpop.xlane.xlu0 %569
    %v571 = vsub.f32 %v560, %v567
    %v572 = vsub.f32 %v563, %v570
    %v573 = vmul.f32 %v571, 1.442695
    %v574 = vpow.pop %v573
    %v575 = vmul.f32 %v572, 1.442695
    %v576 = vpow.pop %v575
    %v577 = vsel %vm116, %v574, 0.0
    %578 = vadd.xlane.f32.xlu0 %v577
    %v579 = vpop.xlane.xlu0 %578
    %v580 = vsel %vm116, %v576, 0.0
    %581 = vadd.xlane.f32.xlu0 %v580
    %v582 = vpop.xlane.xlu0 %581
    %583 = vrot.lane.b32.xlu0 %v235, 80
    %v584 = vpop.permute.xlu0 %583
    %585 = vrot.lane.b32.xlu0 %v236, 80
    %v586 = vpop.permute.xlu0 %585
    %587 = vrot.lane.b32.xlu0 %v237, 80
    %v588 = vpop.permute.xlu0 %587
    %589 = vrot.lane.b32.xlu0 %v238, 80
    %v590 = vpop.permute.xlu0 %589
    %v596 = vsel %vm116, %v574, 0
    %v599 = vsel %vm116, %v576, 0
    %601 = vmatpush.msra.mxu0 0.0
    %602 = vmatpush.msra.mxu0 0.0
    %603 = vmatpush.msra.mxu0 0.0
    %604 = vmatpush.msra.mxu0 0.0
    %605 = vmatpush.msra.mxu0 0.0
    %606 = vmatpush.msra.mxu0 0.0
    %607 = vmatpush.msra.mxu0 0.0
    %608 = vmatpush.msra.mxu0 0.0
    %609 = vmatpush.msra.mxu0 0.0
    %610 = vmatpush.msra.mxu0 0.0
    %611 = vmatpush.msra.mxu0 0.0
    %612 = vmatpush.msra.mxu0 0.0
    %613 = vmatpush.msra.mxu0 %v590
    %614 = vmatpush.msra.mxu0 %v588
    %615 = vmatpush.msra.mxu0 %v586
    %616 = vmatpush.msra.mxu0 %v584
    %617 = vmatmul.f32.gmra.mxu0 %v596
    %v618 = vpop.f32.mrf.mxu0
    %v619 = vadd.f32 0.0, %v618
    %620 = vmatmul.f32.gmra.mxu0 %v599
    %v621 = vpop.f32.mrf.mxu0
    %v622 = vadd.f32 0.0, %v621
    %623 = vdwg.mxu0
    %v624 = vrcp.pop %v579
    %v625 = vrcp.pop %v582
    %v626 = vmul.f32 %v619, %v624
    %v627 = vmul.f32 %v622, %v625
    %v629 = vsel %vm245, %v626, 0
    %v632 = vsel %vm245, %v627, 0
    %634 = vmatpush.msra.mxu0 0.0
    %635 = vmatpush.msra.mxu0 0.0
    %636 = vmatpush.msra.mxu0 0.0
    %637 = vmatpush.msra.mxu0 0.0
    %638 = vmatpush.msra.mxu0 0.0
    %639 = vmatpush.msra.mxu0 0.0
    %640 = vmatpush.msra.mxu0 0.0
    %641 = vmatpush.msra.mxu0 0.0
    %642 = vmatpush.msra.mxu0 0.0
    %643 = vmatpush.msra.mxu0 0.0
    %644 = vmatpush.msra.mxu0 0.0
    %645 = vmatpush.msra.mxu0 0.0
    %646 = vmatpush.msra.mxu0 0.0
    %647 = vmatpush.msra.mxu0 0.0
    %648 = vmatpush.msra.mxu0 0.0
    %649 = vmatpush.msra.mxu0 %v243
    %650 = vmatmul.f32.gmra.mxu0 %v629
    %v651 = vpop.f32.mrf.mxu0
    %v652 = vadd.f32 0.0, %v651
    %653 = vmatmul.f32.gmra.mxu0 %v632
    %v654 = vpop.f32.mrf.mxu0
    %v655 = vadd.f32 0.0, %v654
    %656 = vdwg.mxu0
    %v657 = vadd.f32 %v513, %v652
    %v658 = vadd.f32 %v516, %v655
    %659 = vrot.lane.b32.xlu0 %v160, 104
    %v660 = vpop.permute.xlu0 %659
    %661 = vrot.lane.b32.xlu0 %v161, 104
    %v662 = vpop.permute.xlu0 %661
    %663 = vrot.lane.b32.xlu0 %v235, 104
    %v664 = vpop.permute.xlu0 %663
    %665 = vrot.lane.b32.xlu0 %v236, 104
    %v666 = vpop.permute.xlu0 %665
    %667 = vrot.lane.b32.xlu0 %v237, 104
    %v668 = vpop.permute.xlu0 %667
    %669 = vrot.lane.b32.xlu0 %v238, 104
    %v670 = vpop.permute.xlu0 %669
    %v671 = vsel %vm245, %v660, 0
    %v673 = vsel %vm245, %v662, 0
    %v675 = vsel %vm245, %v664, 0
    %v677 = vsel %vm245, %v666, 0
    %v679 = vsel %vm245, %v668, 0
    %v681 = vsel %vm245, %v670, 0
    %683 = vmatpush.xpose.msra.mxu0 0.0
    %684 = vmatpush.xpose.msra.mxu0 0.0
    %685 = vmatpush.xpose.msra.mxu0 0.0
    %686 = vmatpush.xpose.msra.mxu0 0.0
    %687 = vmatpush.xpose.msra.mxu0 0.0
    %688 = vmatpush.xpose.msra.mxu0 0.0
    %689 = vmatpush.xpose.msra.mxu0 0.0
    %690 = vmatpush.xpose.msra.mxu0 0.0
    %691 = vmatpush.xpose.msra.mxu0 0.0
    %692 = vmatpush.xpose.msra.mxu0 0.0
    %693 = vmatpush.xpose.msra.mxu0 0.0
    %694 = vmatpush.xpose.msra.mxu0 0.0
    %695 = vmatpush.xpose.msra.mxu0 %v681
    %696 = vmatpush.xpose.msra.mxu0 %v679
    %697 = vmatpush.xpose.msra.mxu0 %v677
    %698 = vmatpush.xpose.msra.mxu0 %v675
    %699 = vmatmul.f32.gmra.mxu0 %v671
    %v700 = vpop.f32.mrf.mxu0
    %v701 = vadd.f32 %v239, %v700
    %702 = vmatmul.f32.gmra.mxu0 %v673
    %v703 = vpop.f32.mrf.mxu0
    %v704 = vadd.f32 %v240, %v703
    %705 = vdwg.mxu0
    %v706 = vsel %vm116, %v701, -inf
    %707 = vmax.xlane.f32.xlu0 %v706
    %v708 = vpop.xlane.xlu0 %707
    %v709 = vsel %vm116, %v704, -inf
    %710 = vmax.xlane.f32.xlu0 %v709
    %v711 = vpop.xlane.xlu0 %710
    %v712 = vsub.f32 %v701, %v708
    %v713 = vsub.f32 %v704, %v711
    %v714 = vmul.f32 %v712, 1.442695
    %v715 = vpow.pop %v714
    %v716 = vmul.f32 %v713, 1.442695
    %v717 = vpow.pop %v716
    %v718 = vsel %vm116, %v715, 0.0
    %719 = vadd.xlane.f32.xlu0 %v718
    %v720 = vpop.xlane.xlu0 %719
    %v721 = vsel %vm116, %v717, 0.0
    %722 = vadd.xlane.f32.xlu0 %v721
    %v723 = vpop.xlane.xlu0 %722
    %724 = vrot.lane.b32.xlu0 %v235, 72
    %v725 = vpop.permute.xlu0 %724
    %726 = vrot.lane.b32.xlu0 %v236, 72
    %v727 = vpop.permute.xlu0 %726
    %728 = vrot.lane.b32.xlu0 %v237, 72
    %v729 = vpop.permute.xlu0 %728
    %730 = vrot.lane.b32.xlu0 %v238, 72
    %v731 = vpop.permute.xlu0 %730
    %v737 = vsel %vm116, %v715, 0
    %v740 = vsel %vm116, %v717, 0
    %742 = vmatpush.msra.mxu0 0.0
    %743 = vmatpush.msra.mxu0 0.0
    %744 = vmatpush.msra.mxu0 0.0
    %745 = vmatpush.msra.mxu0 0.0
    %746 = vmatpush.msra.mxu0 0.0
    %747 = vmatpush.msra.mxu0 0.0
    %748 = vmatpush.msra.mxu0 0.0
    %749 = vmatpush.msra.mxu0 0.0
    %750 = vmatpush.msra.mxu0 0.0
    %751 = vmatpush.msra.mxu0 0.0
    %752 = vmatpush.msra.mxu0 0.0
    %753 = vmatpush.msra.mxu0 0.0
    %754 = vmatpush.msra.mxu0 %v731
    %755 = vmatpush.msra.mxu0 %v729
    %756 = vmatpush.msra.mxu0 %v727
    %757 = vmatpush.msra.mxu0 %v725
    %758 = vmatmul.f32.gmra.mxu0 %v737
    %v759 = vpop.f32.mrf.mxu0
    %v760 = vadd.f32 0.0, %v759
    %761 = vmatmul.f32.gmra.mxu0 %v740
    %v762 = vpop.f32.mrf.mxu0
    %v763 = vadd.f32 0.0, %v762
    %764 = vdwg.mxu0
    %v765 = vrcp.pop %v720
    %v766 = vrcp.pop %v723
    %v767 = vmul.f32 %v760, %v765
    %v768 = vmul.f32 %v763, %v766
    %v770 = vsel %vm245, %v767, 0
    %v773 = vsel %vm245, %v768, 0
    %775 = vmatpush.msra.mxu0 0.0
    %776 = vmatpush.msra.mxu0 0.0
    %777 = vmatpush.msra.mxu0 0.0
    %778 = vmatpush.msra.mxu0 0.0
    %779 = vmatpush.msra.mxu0 0.0
    %780 = vmatpush.msra.mxu0 0.0
    %781 = vmatpush.msra.mxu0 0.0
    %782 = vmatpush.msra.mxu0 0.0
    %783 = vmatpush.msra.mxu0 0.0
    %784 = vmatpush.msra.mxu0 0.0
    %785 = vmatpush.msra.mxu0 0.0
    %786 = vmatpush.msra.mxu0 0.0
    %787 = vmatpush.msra.mxu0 0.0
    %788 = vmatpush.msra.mxu0 0.0
    %789 = vmatpush.msra.mxu0 0.0
    %790 = vmatpush.msra.mxu0 %v244
    %791 = vmatmul.f32.gmra.mxu0 %v770
    %v792 = vpop.f32.mrf.mxu0
    %v793 = vadd.f32 0.0, %v792
    %794 = vmatmul.f32.gmra.mxu0 %v773
    %v795 = vpop.f32.mrf.mxu0
    %v796 = vadd.f32 0.0, %v795
    %797 = vdwg.mxu0
    %v798 = vadd.f32 %v657, %v793
    %v799 = vadd.f32 %v658, %v796
    %v800 = vld [vmem:[%s10] sm:$0x1]
    %v802 = vperm.slane %v800, 0
    %v804 = vadd.f32 %v798, %v802
    %v805 = vadd.f32 %v799, %v802
    %806 = vst.msk [vmem:[#allocation10] sm:$0xff] %vm116, %v804
    %807 = vst.msk [vmem:[#allocation10 + $0x8] sm:$0xff] %vm116, %v805
    // Predicated region
    $region62: #{tpu_custom_call.1} parent=1 // pred_check
      _
    $region63: #{tpu_custom_call.1} parent=1 // pred_check_branch
      %809 = sbr.rel (0) target = $region65
    $region64: #{tpu_custom_call.1} parent=1 // pred_region
      %811 = vsyncadd [#allocation4], 0
      %s812 = sshll.u32 [#allocation10], 4
      %s813 = int_to_ptr.vmem [resolvable:$true] %s812
      %s814 = sshll.u32 %s11, 4
      %s815 = int_to_ptr.hbm [resolvable:$true] %s814
      %820 = dma.vmem_to_hbm [thread:$0]  %s813, 256, %s815, [#allocation4], 128, 128, 8
    $region65: #{tpu_custom_call.1} parent=1 // pred_fallthru
      _
    // Predicated region
    $region66: #{tpu_custom_call.1} parent=1 // pred_check
      _
    $region67: #{tpu_custom_call.1} parent=1 // pred_check_branch
      %822 = sbr.rel (0) target = $region69
    $region68: #{tpu_custom_call.1} parent=1 // pred_region
      %824 = dma.done [#allocation4], 256
    $region69: #{tpu_custom_call.1} parent=1 // pred_fallthru
      _
    %825 = vsyncpa [#allocation3], 1
    %826 = vsyncpa [#allocation6], 1
    %827 = vsyncpa [#allocation9], 1
    %828 = vsyncpa [#allocation4], 1

</llo_original>
